<compile_context>
chip_gen: v5e
topology: v5e:2x2
jax: 0.10.0
libtpu: 0.0.40
codegen_flags: <defaults>
</compile_context>

<pallas_src>
import jax
import jax.numpy as jnp
from jax.experimental import pallas as pl
from jax.experimental.pallas import tpu as pltpu

IN_DIM = 16 * 5 * 5          # 400 (multiple of 8 -> sublane aligned)
H1, H2, OUT = 120, 84, 10    # logical feature dims
PAD = 128                    # lane-dense padded feature dim
TM_MAX = 256                 # batch rows per grid step (fills MXU M dim)


def fcnn_kernel(x_ref, w1_ref, b1_ref, w2_ref, b2_ref, w3_ref, b3_ref, o_ref):
    # One batch tile per grid step; whole MLP fused (3 matmuls + bias + ReLU).
    x = x_ref[...]                                                       # (TM, 400) bf16
    h1 = jnp.dot(x, w1_ref[...], preferred_element_type=jnp.float32)     # (TM, 128) f32
    h1 = jnp.maximum(h1 + b1_ref[...], 0.0).astype(jnp.bfloat16)
    h2 = jnp.dot(h1, w2_ref[...], preferred_element_type=jnp.float32)    # (TM, 128) f32
    h2 = jnp.maximum(h2 + b2_ref[...], 0.0).astype(jnp.bfloat16)
    o_ref[...] = (
        jnp.dot(h2, w3_ref[...], preferred_element_type=jnp.float32) + b3_ref[...]
    )                                                                    # (TM, 128) f32


@jax.jit
def fcnn_forward(x_nchw, params):
    """x_nchw: (B, 16, 5, 5) float32 -> logits (B, 10) float32."""
    w1, b1, w2, b2, w3, b3 = params  # bf16 weights (in,128-pad), f32 biases (1,128)
    B = x_nchw.shape[0]
    x = x_nchw.reshape(B, IN_DIM)                      # same as torch x.view(-1, 400)

    # Batch tile: up to 256 rows, always a multiple of 8 (sublane); pad batch to tiles.
    TM = min(TM_MAX, max(8, ((B + 7) // 8) * 8))
    B_pad = ((B + TM - 1) // TM) * TM
    if B_pad != B:
        x = jnp.pad(x, ((0, B_pad - B), (0, 0)))
    x = x.astype(jnp.bfloat16)

    n_tiles = B_pad // TM
    weight_spec = lambda a: pl.BlockSpec(a.shape, lambda i: (0, 0))

    bytes_accessed = (
        (IN_DIM * PAD + 2 * PAD * PAD) * 2           # bf16 weights (read once)
        + 3 * PAD * 4                                # f32 biases
        + B_pad * (IN_DIM * 2 + PAD * 4)             # bf16 x in, f32 logits out
    )
    cost = pl.CostEstimate(
        flops=2 * B_pad * (IN_DIM * PAD + PAD * PAD + PAD * PAD),
        transcendentals=0,
        bytes_accessed=bytes_accessed,
    )

    logits_padded = pl.pallas_call(
        fcnn_kernel,
        out_shape=jax.ShapeDtypeStruct((B_pad, PAD), jnp.float32),
        grid=(n_tiles,),
        in_specs=[
            pl.BlockSpec((TM, IN_DIM), lambda i: (i, 0)),   # x: batch-tiled
            weight_spec(w1), weight_spec(b1),               # weights/biases VMEM-resident
            weight_spec(w2), weight_spec(b2),
            weight_spec(w3), weight_spec(b3),
        ],
        out_specs=pl.BlockSpec((TM, PAD), lambda i: (i, 0)),
        compiler_params=pltpu.CompilerParams(
            dimension_semantics=("parallel",),
        ),
        cost_estimate=cost,
    )(x, w1, b1, w2, b2, w3, b3)

    return logits_padded[:B, :OUT]


def init_params(key):
    """torch.nn.Linear-style init (uniform +-1/sqrt(fan_in)), stored transposed as
    (in, out), zero-padded so every feature dim is lane-dense (128), weights in bf16."""
    dims = [(IN_DIM, H1), (H1, H2), (H2, OUT)]
    pad_in = [IN_DIM, PAD, PAD]   # padded input dims of each layer
    params = []
    for (fan_in, fan_out), p_in in zip(dims, pad_in):
        key, kw, kb = jax.random.split(key, 3)
        bound = 1.0 / jnp.sqrt(float(fan_in))
        w = jax.random.uniform(kw, (fan_in, fan_out), jnp.float32, -bound, bound)
        b = jax.random.uniform(kb, (1, fan_out), jnp.float32, -bound, bound)
        w_pad = jnp.zeros((p_in, PAD), jnp.float32).at[:fan_in, :fan_out].set(w)
        b_pad = jnp.zeros((1, PAD), jnp.float32).at[:, :fan_out].set(b)
        params.extend([w_pad.astype(jnp.bfloat16), b_pad])
    return tuple(params)


def _reference(x_nchw, params):
    """Plain-JAX reference mimicking the kernel's bf16-matmul / f32-accumulate path."""
    w1, b1, w2, b2, w3, b3 = params
    B = x_nchw.shape[0]
    f32 = lambda a: a.astype(jnp.float32)
    x = f32(x_nchw.reshape(B, IN_DIM).astype(jnp.bfloat16))
    h1 = jnp.maximum(x @ f32(w1) + b1, 0.0).astype(jnp.bfloat16).astype(jnp.float32)
    h2 = jnp.maximum(h1 @ f32(w2) + b2, 0.0).astype(jnp.bfloat16).astype(jnp.float32)
    return (h2 @ f32(w3) + b3)[:, :OUT]


if __name__ == "__main__":
    key = jax.random.PRNGKey(0)
    key, kx = jax.random.split(key)
    # Small batch; spatial/channel shapes are fixed by the module (16*5*5 = 400).
    B = 4
    x = jax.random.normal(kx, (B, 16, 5, 5), dtype=jnp.float32)
    params = init_params(key)

    out = fcnn_forward(x, params)
    out = jax.block_until_ready(out)

    ref = _reference(x, params)
    assert out.shape == (B, OUT)
    assert jnp.allclose(out, ref, atol=2e-2, rtol=2e-2), (
        float(jnp.max(jnp.abs(out - ref)))
    )

    print("KERNEL_OK")
</pallas_src>

<mosaic_0001>
module attributes {stable_mosaic.version = 11 : i64} {
  func.func @fcnn_kernel(%arg0: i32, %arg1: memref<8x400xbf16, #tpu.memory_space<vmem>>, %arg2: memref<400x128xbf16, #tpu.memory_space<vmem>>, %arg3: memref<1x128xf32, #tpu.memory_space<vmem>>, %arg4: memref<128x128xbf16, #tpu.memory_space<vmem>>, %arg5: memref<1x128xf32, #tpu.memory_space<vmem>>, %arg6: memref<128x128xbf16, #tpu.memory_space<vmem>>, %arg7: memref<1x128xf32, #tpu.memory_space<vmem>>, %arg8: memref<8x128xf32, #tpu.memory_space<vmem>>) attributes {dimension_semantics = [#tpu.dimension_semantics<parallel>], iteration_bounds = array<i64: 1>, scalar_prefetch = 0 : i64, scratch_operands = 0 : i64, tpu.core_type = #tpu.core_type<tc>, window_params = [{transform_indices = @transform_0, window_bounds = array<i64: 8, 400>}, {pipeline_mode = #tpu.pipeline_mode<synchronous>, transform_indices = @transform_1, window_bounds = array<i64: 400, 128>}, {pipeline_mode = #tpu.pipeline_mode<synchronous>, transform_indices = @transform_2, window_bounds = array<i64: 1, 128>}, {pipeline_mode = #tpu.pipeline_mode<synchronous>, transform_indices = @transform_3, window_bounds = array<i64: 128, 128>}, {pipeline_mode = #tpu.pipeline_mode<synchronous>, transform_indices = @transform_4, window_bounds = array<i64: 1, 128>}, {pipeline_mode = #tpu.pipeline_mode<synchronous>, transform_indices = @transform_5, window_bounds = array<i64: 128, 128>}, {pipeline_mode = #tpu.pipeline_mode<synchronous>, transform_indices = @transform_6, window_bounds = array<i64: 1, 128>}, {transform_indices = @transform_7, window_bounds = array<i64: 8, 128>}]} {
    %c0 = arith.constant 0 : index
    %c0_0 = arith.constant 0 : index
    %0 = vector.load %arg1[%c0, %c0_0] : memref<8x400xbf16, #tpu.memory_space<vmem>>, vector<8x400xbf16>
    %c0_1 = arith.constant 0 : index
    %c0_2 = arith.constant 0 : index
    %1 = vector.load %arg2[%c0_1, %c0_2] : memref<400x128xbf16, #tpu.memory_space<vmem>>, vector<400x128xbf16>
    %cst = arith.constant dense<0.000000e+00> : vector<8x128xf32>
    %2 = tpu.matmul %0, %1, %cst {dimension_numbers = #tpu.dot_dimension_numbers<[1], [0], [0], [1], [0, 0, 1, 1], [], []>} : vector<8x400xbf16>, vector<400x128xbf16>, vector<8x128xf32> -> vector<8x128xf32>
    %c0_3 = arith.constant 0 : index
    %c0_4 = arith.constant 0 : index
    %3 = vector.load %arg3[%c0_3, %c0_4] : memref<1x128xf32, #tpu.memory_space<vmem>>, vector<1x128xf32>
    %4 = vector.broadcast %3 : vector<1x128xf32> to vector<8x128xf32>
    %5 = arith.addf %2, %4 : vector<8x128xf32>
    %cst_5 = arith.constant 0.000000e+00 : f32
    %6 = vector.broadcast %cst_5 : f32 to vector<8x128xf32>
    %7 = arith.maximumf %5, %6 : vector<8x128xf32>
    %8 = arith.truncf %7 : vector<8x128xf32> to vector<8x128xbf16>
    %c0_6 = arith.constant 0 : index
    %c0_7 = arith.constant 0 : index
    %9 = vector.load %arg4[%c0_6, %c0_7] : memref<128x128xbf16, #tpu.memory_space<vmem>>, vector<128x128xbf16>
    %cst_8 = arith.constant dense<0.000000e+00> : vector<8x128xf32>
    %10 = tpu.matmul %8, %9, %cst_8 {dimension_numbers = #tpu.dot_dimension_numbers<[1], [0], [0], [1], [0, 0, 1, 1], [], []>} : vector<8x128xbf16>, vector<128x128xbf16>, vector<8x128xf32> -> vector<8x128xf32>
    %c0_9 = arith.constant 0 : index
    %c0_10 = arith.constant 0 : index
    %11 = vector.load %arg5[%c0_9, %c0_10] : memref<1x128xf32, #tpu.memory_space<vmem>>, vector<1x128xf32>
    %12 = vector.broadcast %11 : vector<1x128xf32> to vector<8x128xf32>
    %13 = arith.addf %10, %12 : vector<8x128xf32>
    %cst_11 = arith.constant 0.000000e+00 : f32
    %14 = vector.broadcast %cst_11 : f32 to vector<8x128xf32>
    %15 = arith.maximumf %13, %14 : vector<8x128xf32>
    %16 = arith.truncf %15 : vector<8x128xf32> to vector<8x128xbf16>
    %c0_12 = arith.constant 0 : index
    %c0_13 = arith.constant 0 : index
    %17 = vector.load %arg6[%c0_12, %c0_13] : memref<128x128xbf16, #tpu.memory_space<vmem>>, vector<128x128xbf16>
    %cst_14 = arith.constant dense<0.000000e+00> : vector<8x128xf32>
    %18 = tpu.matmul %16, %17, %cst_14 {dimension_numbers = #tpu.dot_dimension_numbers<[1], [0], [0], [1], [0, 0, 1, 1], [], []>} : vector<8x128xbf16>, vector<128x128xbf16>, vector<8x128xf32> -> vector<8x128xf32>
    %c0_15 = arith.constant 0 : index
    %c0_16 = arith.constant 0 : index
    %19 = vector.load %arg7[%c0_15, %c0_16] : memref<1x128xf32, #tpu.memory_space<vmem>>, vector<1x128xf32>
    %20 = vector.broadcast %19 : vector<1x128xf32> to vector<8x128xf32>
    %21 = arith.addf %18, %20 : vector<8x128xf32>
    %c0_17 = arith.constant 0 : index
    %c0_18 = arith.constant 0 : index
    %22 = vector.load %arg8[%c0_17, %c0_18] : memref<8x128xf32, #tpu.memory_space<vmem>>, vector<8x128xf32>
    tpu.vector_store %arg8[%c0_17, %c0_18], %21 {strides = array<i32>} : memref<8x128xf32, #tpu.memory_space<vmem>>, vector<8x128xf32>,
    return
  }
  func.func @transform_0(%arg0: i32) -> (i32, i32) {
    %c0_i32 = arith.constant 0 : i32
    %c0_i32_0 = arith.constant 0 : i32
    return %arg0, %c0_i32 : i32, i32
  }
  func.func @transform_1(%arg0: i32) -> (i32, i32) {
    %c0_i32 = arith.constant 0 : i32
    %c0_i32_0 = arith.constant 0 : i32
    %c0_i32_1 = arith.constant 0 : i32
    return %c0_i32, %c0_i32_0 : i32, i32
  }
  func.func @transform_2(%arg0: i32) -> (i32, i32) {
    %c0_i32 = arith.constant 0 : i32
    %c0_i32_0 = arith.constant 0 : i32
    %c0_i32_1 = arith.constant 0 : i32
    return %c0_i32, %c0_i32_0 : i32, i32
  }
  func.func @transform_3(%arg0: i32) -> (i32, i32) {
    %c0_i32 = arith.constant 0 : i32
    %c0_i32_0 = arith.constant 0 : i32
    %c0_i32_1 = arith.constant 0 : i32
    return %c0_i32, %c0_i32_0 : i32, i32
  }
  func.func @transform_4(%arg0: i32) -> (i32, i32) {
    %c0_i32 = arith.constant 0 : i32
    %c0_i32_0 = arith.constant 0 : i32
    %c0_i32_1 = arith.constant 0 : i32
    return %c0_i32, %c0_i32_0 : i32, i32
  }
  func.func @transform_5(%arg0: i32) -> (i32, i32) {
    %c0_i32 = arith.constant 0 : i32
    %c0_i32_0 = arith.constant 0 : i32
    %c0_i32_1 = arith.constant 0 : i32
    return %c0_i32, %c0_i32_0 : i32, i32
  }
  func.func @transform_6(%arg0: i32) -> (i32, i32) {
    %c0_i32 = arith.constant 0 : i32
    %c0_i32_0 = arith.constant 0 : i32
    %c0_i32_1 = arith.constant 0 : i32
    return %c0_i32, %c0_i32_0 : i32, i32
  }
  func.func @transform_7(%arg0: i32) -> (i32, i32) {
    %c0_i32 = arith.constant 0 : i32
    %c0_i32_0 = arith.constant 0 : i32
    return %arg0, %c0_i32 : i32, i32
  }
}

</mosaic_0001>

<llo_original>
// kernel: fcnn_forward.1
$region0: #{fcnn_forward.1}
  #allocation0 [shape = 'u32[]', space=smem, size = 0x4, offset = 0x4, fixed_abs, tag = 'smem constant byte address 0x4 - core index']
  #allocation1 [shape = 'u32[72,128]{1,0:T(1,128)}', space=vmem, size = 0x9000, scoped, tag = 'internal scratch']
  %s0 = inlined_call_operand.vmem [shape: bf16[8,400], index: 0, kind: input, shape index: {}]
  %s1 = inlined_call_operand.vmem [shape: bf16[400,128], index: 1, kind: input, shape index: {}]
  %s2 = inlined_call_operand.vmem [shape: f32[1,128], index: 2, kind: input, shape index: {}]
  %s3 = inlined_call_operand.vmem [shape: bf16[128,128], index: 3, kind: input, shape index: {}]
  %s4 = inlined_call_operand.vmem [shape: f32[1,128], index: 4, kind: input, shape index: {}]
  %s5 = inlined_call_operand.vmem [shape: bf16[128,128], index: 5, kind: input, shape index: {}]
  %s6 = inlined_call_operand.vmem [shape: f32[1,128], index: 6, kind: input, shape index: {}]
  %s7 = inlined_call_operand.vmem [shape: f32[8,128], index: 7, kind: output, shape index: {}]
  %s8 = sld [smem:[#allocation0]]
  $region38: #{fcnn_forward.1} parent=0
    _
  %s10 = ssub.s32 1, %s8
  %s11 = scalar_select 0, %s10, %s8
  // Predicated region
  $region2: #{fcnn_forward.1} parent=0 // pred_check
    _
  $region3: #{fcnn_forward.1} parent=0 // pred_check_branch
    %13 = sbr.rel (0) target = $region5
  $region4: #{fcnn_forward.1} parent=0 // pred_region
    _
  $region5: #{fcnn_forward.1} parent=0 // pred_fallthru
    _
  // Predicated region
  $region6: #{fcnn_forward.1} parent=0 // pred_check
    _
  $region7: #{fcnn_forward.1} parent=0 // pred_check_branch
    %15 = sbr.rel (0) target = $region9
  $region8: #{fcnn_forward.1} parent=0 // pred_region
    _
  $region9: #{fcnn_forward.1} parent=0 // pred_fallthru
    _
  // Predicated region
  $region10: #{fcnn_forward.1} parent=0 // pred_check
    _
  $region11: #{fcnn_forward.1} parent=0 // pred_check_branch
    %17 = sbr.rel (0) target = $region13
  $region12: #{fcnn_forward.1} parent=0 // pred_region
    _
  $region13: #{fcnn_forward.1} parent=0 // pred_fallthru
    _
  // Predicated region
  $region14: #{fcnn_forward.1} parent=0 // pred_check
    _
  $region15: #{fcnn_forward.1} parent=0 // pred_check_branch
    %19 = sbr.rel (0) target = $region17
  $region16: #{fcnn_forward.1} parent=0 // pred_region
    _
  $region17: #{fcnn_forward.1} parent=0 // pred_fallthru
    _
  // Predicated region
  $region18: #{fcnn_forward.1} parent=0 // pred_check
    _
  $region19: #{fcnn_forward.1} parent=0 // pred_check_branch
    %21 = sbr.rel (0) target = $region21
  $region20: #{fcnn_forward.1} parent=0 // pred_region
    _
  $region21: #{fcnn_forward.1} parent=0 // pred_fallthru
    _
  // Predicated region
  $region22: #{fcnn_forward.1} parent=0 // pred_check
    _
  $region23: #{fcnn_forward.1} parent=0 // pred_check_branch
    %23 = sbr.rel (0) target = $region25
  $region24: #{fcnn_forward.1} parent=0 // pred_region
    _
  $region25: #{fcnn_forward.1} parent=0 // pred_fallthru
    _
  // Predicated region
  $region26: #{fcnn_forward.1} parent=0 // pred_check
    _
  $region27: #{fcnn_forward.1} parent=0 // pred_check_branch
    %25 = sbr.rel (0) target = $region29
  $region28: #{fcnn_forward.1} parent=0 // pred_region
    _
  $region29: #{fcnn_forward.1} parent=0 // pred_fallthru
    _
  %v27 = vld [vmem:[%s0] sm:$0xff]
  %v28 = vld [vmem:[%s0 + $0x8] sm:$0xff]
  %v29 = vld [vmem:[%s1] sm:$0xf]
  %v30 = vld [vmem:[%s1 + $0x4] sm:$0xf]
  %v31 = vld [vmem:[%s1 + $0x8] sm:$0xf]
  %v32 = vld [vmem:[%s1 + $0xc] sm:$0xf]
  %v33 = vld [vmem:[%s1 + $0x10] sm:$0xf]
  %v34 = vld [vmem:[%s1 + $0x14] sm:$0xf]
  %v35 = vld [vmem:[%s1 + $0x18] sm:$0xf]
  %v36 = vld [vmem:[%s1 + $0x1c] sm:$0xf]
  %v37 = vld [vmem:[%s1 + $0x20] sm:$0xf]
  %v38 = vld [vmem:[%s1 + $0x24] sm:$0xf]
  %v39 = vld [vmem:[%s1 + $0x28] sm:$0xf]
  %v40 = vld [vmem:[%s1 + $0x2c] sm:$0xf]
  %v41 = vld [vmem:[%s1 + $0x30] sm:$0xf]
  %v42 = vld [vmem:[%s1 + $0x34] sm:$0xf]
  %v43 = vld [vmem:[%s1 + $0x38] sm:$0xf]
  %v44 = vld [vmem:[%s1 + $0x3c] sm:$0xf]
  %v45 = vld [vmem:[%s1 + $0x40] sm:$0xf]
  %v46 = vld [vmem:[%s1 + $0x44] sm:$0xf]
  %v47 = vld [vmem:[%s1 + $0x48] sm:$0xf]
  %v48 = vld [vmem:[%s1 + $0x4c] sm:$0xf]
  %v49 = vld [vmem:[%s1 + $0x50] sm:$0xf]
  %v50 = vld [vmem:[%s1 + $0x54] sm:$0xf]
  %v51 = vld [vmem:[%s1 + $0x58] sm:$0xf]
  %v52 = vld [vmem:[%s1 + $0x5c] sm:$0xf]
  %v53 = vld [vmem:[%s1 + $0x60] sm:$0xf]
  %v54 = vld [vmem:[%s1 + $0x64] sm:$0xf]
  %v55 = vld [vmem:[%s1 + $0x68] sm:$0xf]
  %v56 = vld [vmem:[%s1 + $0x6c] sm:$0xf]
  %v57 = vld [vmem:[%s1 + $0x70] sm:$0xf]
  %v58 = vld [vmem:[%s1 + $0x74] sm:$0xf]
  %v59 = vld [vmem:[%s1 + $0x78] sm:$0xf]
  %v60 = vld [vmem:[%s1 + $0x7c] sm:$0xf]
  %v61 = vld [vmem:[%s1 + $0x80] sm:$0xf]
  %v62 = vld [vmem:[%s1 + $0x84] sm:$0xf]
  %v63 = vld [vmem:[%s1 + $0x88] sm:$0xf]
  %v64 = vld [vmem:[%s1 + $0x8c] sm:$0xf]
  %v65 = vld [vmem:[%s1 + $0x90] sm:$0xf]
  %v66 = vld [vmem:[%s1 + $0x94] sm:$0xf]
  %v67 = vld [vmem:[%s1 + $0x98] sm:$0xf]
  %v68 = vld [vmem:[%s1 + $0x9c] sm:$0xf]
  %v69 = vld [vmem:[%s1 + $0xa0] sm:$0xf]
  %v70 = vld [vmem:[%s1 + $0xa4] sm:$0xf]
  %v71 = vld [vmem:[%s1 + $0xa8] sm:$0xf]
  %v72 = vld [vmem:[%s1 + $0xac] sm:$0xf]
  %v73 = vld [vmem:[%s1 + $0xb0] sm:$0xf]
  %v74 = vld [vmem:[%s1 + $0xb4] sm:$0xf]
  %v75 = vld [vmem:[%s1 + $0xb8] sm:$0xf]
  %v76 = vld [vmem:[%s1 + $0xbc] sm:$0xf]
  %v77 = vld [vmem:[%s1 + $0xc0] sm:$0xf]
  %v78 = vld [vmem:[%s1 + $0xc4] sm:$0xf]
  %v79 = vld [vmem:[%s2] sm:$0x1]
  %v81 = vperm.slane %v79, 0
  %v85 = vunpack.c.l.b16 %v27
  %v86 = vunpack.c.h.b16 %v27
  %v87 = vunpack.c.l.b16 %v28
  %v88 = vunpack.c.h.b16 %v28
  %v89 = vpack.c.b16 %v85, %v85
  %v90 = vpack.c.b16 %v86, %v86
  %v91 = vpack.c.b16 %v87, %v87
  %v92 = vpack.c.b16 %v88, %v88
  %v146 = vunpack.c.l.b16 %v29
  %v147 = vunpack.c.l.b16 %v30
  %v148 = vunpack.c.l.b16 %v31
  %v149 = vunpack.c.l.b16 %v32
  %v150 = vunpack.c.l.b16 %v33
  %v151 = vunpack.c.l.b16 %v34
  %v152 = vunpack.c.l.b16 %v35
  %v153 = vunpack.c.l.b16 %v36
  %v154 = vunpack.c.l.b16 %v37
  %v155 = vunpack.c.l.b16 %v38
  %v156 = vunpack.c.l.b16 %v39
  %v157 = vunpack.c.l.b16 %v40
  %v158 = vunpack.c.l.b16 %v41
  %v159 = vunpack.c.l.b16 %v42
  %v160 = vunpack.c.l.b16 %v43
  %v161 = vunpack.c.l.b16 %v44
  %v162 = vunpack.c.l.b16 %v45
  %v163 = vunpack.c.l.b16 %v46
  %v164 = vunpack.c.l.b16 %v47
  %v165 = vunpack.c.l.b16 %v48
  %v166 = vunpack.c.l.b16 %v49
  %v167 = vunpack.c.l.b16 %v50
  %v168 = vunpack.c.l.b16 %v51
  %v169 = vunpack.c.l.b16 %v52
  %v170 = vunpack.c.l.b16 %v53
  %v171 = vunpack.c.l.b16 %v54
  %v172 = vunpack.c.l.b16 %v55
  %v173 = vunpack.c.l.b16 %v56
  %v174 = vunpack.c.l.b16 %v57
  %v175 = vunpack.c.l.b16 %v58
  %v176 = vunpack.c.l.b16 %v59
  %v177 = vunpack.c.l.b16 %v60
  %v178 = vunpack.c.l.b16 %v61
  %v179 = vunpack.c.l.b16 %v62
  %v180 = vunpack.c.l.b16 %v63
  %v181 = vunpack.c.l.b16 %v64
  %v182 = vunpack.c.l.b16 %v65
  %v183 = vunpack.c.l.b16 %v66
  %v184 = vunpack.c.l.b16 %v67
  %v185 = vunpack.c.l.b16 %v68
  %v186 = vunpack.c.l.b16 %v69
  %v187 = vunpack.c.l.b16 %v70
  %v188 = vunpack.c.l.b16 %v71
  %v189 = vunpack.c.l.b16 %v72
  %v190 = vunpack.c.l.b16 %v73
  %v191 = vunpack.c.l.b16 %v74
  %v192 = vunpack.c.l.b16 %v75
  %v193 = vunpack.c.l.b16 %v76
  %v194 = vunpack.c.l.b16 %v77
  %v195 = vunpack.c.l.b16 %v78
  %v196 = vpack.c.b16 %v147, %v146
  %v197 = vpack.c.b16 %v149, %v148
  %v198 = vpack.c.b16 %v151, %v150
  %v199 = vpack.c.b16 %v153, %v152
  %v200 = vpack.c.b16 %v155, %v154
  %v201 = vpack.c.b16 %v157, %v156
  %v202 = vpack.c.b16 %v159, %v158
  %v203 = vpack.c.b16 %v161, %v160
  %v204 = vpack.c.b16 %v163, %v162
  %v205 = vpack.c.b16 %v165, %v164
  %v206 = vpack.c.b16 %v167, %v166
  %v207 = vpack.c.b16 %v169, %v168
  %v208 = vpack.c.b16 %v171, %v170
  %v209 = vpack.c.b16 %v173, %v172
  %v210 = vpack.c.b16 %v175, %v174
  %v211 = vpack.c.b16 %v177, %v176
  %v212 = vpack.c.b16 %v179, %v178
  %v213 = vpack.c.b16 %v181, %v180
  %v214 = vpack.c.b16 %v183, %v182
  %v215 = vpack.c.b16 %v185, %v184
  %v216 = vpack.c.b16 %v187, %v186
  %v217 = vpack.c.b16 %v189, %v188
  %v218 = vpack.c.b16 %v191, %v190
  %v219 = vpack.c.b16 %v193, %v192
  %v220 = vpack.c.b16 %v195, %v194
  %vm246 = vcmask 130048
  %v248 = vsel %vm246, %v92, 0
  %250 = vmatpush.bf16.msra.mxu0 %v203
  %251 = vmatpush.bf16.msra.mxu0 %v202
  %252 = vmatpush.bf16.msra.mxu0 %v201
  %253 = vmatpush.bf16.msra.mxu0 %v200
  %254 = vmatpush.bf16.msra.mxu0 %v199
  %255 = vmatpush.bf16.msra.mxu0 %v198
  %256 = vmatpush.bf16.msra.mxu0 %v197
  %257 = vmatpush.bf16.msra.mxu0 %v196
  %258 = vmatmul.bf16.gmra.mxu0 %v89
  %v259 = vpop.f32.mrf.mxu0
  %v260 = vadd.f32 %v81, %v259
  %v261 = vpop.f32.mrf.mxu0
  %262 = vdwg.mxu0
  %263 = vmatpush.bf16.msra.mxu0 %v211
  %264 = vmatpush.bf16.msra.mxu0 %v210
  %265 = vmatpush.bf16.msra.mxu0 %v209
  %266 = vmatpush.bf16.msra.mxu0 %v208
  %267 = vmatpush.bf16.msra.mxu0 %v207
  %268 = vmatpush.bf16.msra.mxu0 %v206
  %269 = vmatpush.bf16.msra.mxu0 %v205
  %270 = vmatpush.bf16.msra.mxu0 %v204
  %271 = vmatmul.bf16.gmra.mxu0 %v90
  %v272 = vpop.f32.mrf.mxu0
  %v273 = vadd.f32 %v260, %v272
  %v274 = vpop.f32.mrf.mxu0
  %275 = vdwg.mxu0
  %276 = vmatpush.bf16.msra.mxu0 %v219
  %277 = vmatpush.bf16.msra.mxu0 %v218
  %278 = vmatpush.bf16.msra.mxu0 %v217
  %279 = vmatpush.bf16.msra.mxu0 %v216
  %280 = vmatpush.bf16.msra.mxu0 %v215
  %281 = vmatpush.bf16.msra.mxu0 %v214
  %282 = vmatpush.bf16.msra.mxu0 %v213
  %283 = vmatpush.bf16.msra.mxu0 %v212
  %284 = vmatmul.bf16.gmra.mxu0 %v91
  %v285 = vpop.f32.mrf.mxu0
  %v286 = vadd.f32 %v273, %v285
  %v287 = vpop.f32.mrf.mxu0
  %288 = vdwg.mxu0
  %289 = vmatpush.bf16.msra.mxu0 0
  %290 = vmatpush.bf16.msra.mxu0 0
  %291 = vmatpush.bf16.msra.mxu0 0
  %292 = vmatpush.bf16.msra.mxu0 0
  %293 = vmatpush.bf16.msra.mxu0 0
  %294 = vmatpush.bf16.msra.mxu0 0
  %295 = vmatpush.bf16.msra.mxu0 0
  %296 = vmatpush.bf16.msra.mxu0 %v220
  %297 = vmatmul.bf16.gmra.mxu0 %v248
  %v298 = vpop.f32.mrf.mxu0
  %v299 = vadd.f32 %v286, %v298
  %v300 = vpop.f32.mrf.mxu0
  %301 = vdwg.mxu0
  %v302 = vmax.f32 %v299, 0.0
  %v303 = vpack.c.bf16 %v302, %v302
  %v304 = vld [vmem:[%s3] sm:$0xf]
  %v305 = vld [vmem:[%s3 + $0x4] sm:$0xf]
  %v306 = vld [vmem:[%s3 + $0x8] sm:$0xf]
  %v307 = vld [vmem:[%s3 + $0xc] sm:$0xf]
  %v308 = vld [vmem:[%s3 + $0x10] sm:$0xf]
  %v309 = vld [vmem:[%s3 + $0x14] sm:$0xf]
  %v310 = vld [vmem:[%s3 + $0x18] sm:$0xf]
  %v311 = vld [vmem:[%s3 + $0x1c] sm:$0xf]
  %v312 = vld [vmem:[%s3 + $0x20] sm:$0xf]
  %v313 = vld [vmem:[%s3 + $0x24] sm:$0xf]
  %v314 = vld [vmem:[%s3 + $0x28] sm:$0xf]
  %v315 = vld [vmem:[%s3 + $0x2c] sm:$0xf]
  %v316 = vld [vmem:[%s3 + $0x30] sm:$0xf]
  %v317 = vld [vmem:[%s3 + $0x34] sm:$0xf]
  %v318 = vld [vmem:[%s3 + $0x38] sm:$0xf]
  %v319 = vld [vmem:[%s3 + $0x3c] sm:$0xf]
  %v320 = vld [vmem:[%s4] sm:$0x1]
  %v322 = vperm.slane %v320, 0
  %v340 = vunpack.c.l.b16 %v304
  %v341 = vunpack.c.l.b16 %v305
  %v342 = vunpack.c.l.b16 %v306
  %v343 = vunpack.c.l.b16 %v307
  %v344 = vunpack.c.l.b16 %v308
  %v345 = vunpack.c.l.b16 %v309
  %v346 = vunpack.c.l.b16 %v310
  %v347 = vunpack.c.l.b16 %v311
  %v348 = vunpack.c.l.b16 %v312
  %v349 = vunpack.c.l.b16 %v313
  %v350 = vunpack.c.l.b16 %v314
  %v351 = vunpack.c.l.b16 %v315
  %v352 = vunpack.c.l.b16 %v316
  %v353 = vunpack.c.l.b16 %v317
  %v354 = vunpack.c.l.b16 %v318
  %v355 = vunpack.c.l.b16 %v319
  %v356 = vpack.c.b16 %v341, %v340
  %v357 = vpack.c.b16 %v343, %v342
  %v358 = vpack.c.b16 %v345, %v344
  %v359 = vpack.c.b16 %v347, %v346
  %v360 = vpack.c.b16 %v349, %v348
  %v361 = vpack.c.b16 %v351, %v350
  %v362 = vpack.c.b16 %v353, %v352
  %v363 = vpack.c.b16 %v355, %v354
  %372 = vmatpush.bf16.msra.mxu0 %v363
  %373 = vmatpush.bf16.msra.mxu0 %v362
  %374 = vmatpush.bf16.msra.mxu0 %v361
  %375 = vmatpush.bf16.msra.mxu0 %v360
  %376 = vmatpush.bf16.msra.mxu0 %v359
  %377 = vmatpush.bf16.msra.mxu0 %v358
  %378 = vmatpush.bf16.msra.mxu0 %v357
  %379 = vmatpush.bf16.msra.mxu0 %v356
  %380 = vmatmul.bf16.gmra.mxu0 %v303
  %v381 = vpop.f32.mrf.mxu0
  %v382 = vadd.f32 %v322, %v381
  %v383 = vpop.f32.mrf.mxu0
  %384 = vdwg.mxu0
  %v385 = vmax.f32 %v382, 0.0
  %v386 = vpack.c.bf16 %v385, %v385
  %v387 = vld [vmem:[%s5] sm:$0xf]
  %v388 = vld [vmem:[%s5 + $0x4] sm:$0xf]
  %v389 = vld [vmem:[%s5 + $0x8] sm:$0xf]
  %v390 = vld [vmem:[%s5 + $0xc] sm:$0xf]
  %v391 = vld [vmem:[%s5 + $0x10] sm:$0xf]
  %v392 = vld [vmem:[%s5 + $0x14] sm:$0xf]
  %v393 = vld [vmem:[%s5 + $0x18] sm:$0xf]
  %v394 = vld [vmem:[%s5 + $0x1c] sm:$0xf]
  %v395 = vld [vmem:[%s5 + $0x20] sm:$0xf]
  %v396 = vld [vmem:[%s5 + $0x24] sm:$0xf]
  %v397 = vld [vmem:[%s5 + $0x28] sm:$0xf]
  %v398 = vld [vmem:[%s5 + $0x2c] sm:$0xf]
  %v399 = vld [vmem:[%s5 + $0x30] sm:$0xf]
  %v400 = vld [vmem:[%s5 + $0x34] sm:$0xf]
  %v401 = vld [vmem:[%s5 + $0x38] sm:$0xf]
  %v402 = vld [vmem:[%s5 + $0x3c] sm:$0xf]
  %v403 = vld [vmem:[%s6] sm:$0x1]
  %v405 = vperm.slane %v403, 0
  %v423 = vunpack.c.l.b16 %v387
  %v424 = vunpack.c.l.b16 %v388
  %v425 = vunpack.c.l.b16 %v389
  %v426 = vunpack.c.l.b16 %v390
  %v427 = vunpack.c.l.b16 %v391
  %v428 = vunpack.c.l.b16 %v392
  %v429 = vunpack.c.l.b16 %v393
  %v430 = vunpack.c.l.b16 %v394
  %v431 = vunpack.c.l.b16 %v395
  %v432 = vunpack.c.l.b16 %v396
  %v433 = vunpack.c.l.b16 %v397
  %v434 = vunpack.c.l.b16 %v398
  %v435 = vunpack.c.l.b16 %v399
  %v436 = vunpack.c.l.b16 %v400
  %v437 = vunpack.c.l.b16 %v401
  %v438 = vunpack.c.l.b16 %v402
  %v439 = vpack.c.b16 %v424, %v423
  %v440 = vpack.c.b16 %v426, %v425
  %v441 = vpack.c.b16 %v428, %v427
  %v442 = vpack.c.b16 %v430, %v429
  %v443 = vpack.c.b16 %v432, %v431
  %v444 = vpack.c.b16 %v434, %v433
  %v445 = vpack.c.b16 %v436, %v435
  %v446 = vpack.c.b16 %v438, %v437
  %455 = vmatpush.bf16.msra.mxu0 %v446
  %456 = vmatpush.bf16.msra.mxu0 %v445
  %457 = vmatpush.bf16.msra.mxu0 %v444
  %458 = vmatpush.bf16.msra.mxu0 %v443
  %459 = vmatpush.bf16.msra.mxu0 %v442
  %460 = vmatpush.bf16.msra.mxu0 %v441
  %461 = vmatpush.bf16.msra.mxu0 %v440
  %462 = vmatpush.bf16.msra.mxu0 %v439
  %463 = vmatmul.bf16.gmra.mxu0 %v386
  %v464 = vpop.f32.mrf.mxu0
  %v465 = vadd.f32 %v405, %v464
  %v466 = vpop.f32.mrf.mxu0
  %467 = vdwg.mxu0
  %468 = vst [vmem:[%s7] sm:$0xff] %v465
  // Predicated region
  $region30: #{fcnn_forward.1} parent=0 // pred_check
    _
  $region31: #{fcnn_forward.1} parent=0 // pred_check_branch
    %470 = sbr.rel (0) target = $region33
  $region32: #{fcnn_forward.1} parent=0 // pred_region
    _
  $region33: #{fcnn_forward.1} parent=0 // pred_fallthru
    _
  // Predicated region
  $region34: #{fcnn_forward.1} parent=0 // pred_check
    _
  $region35: #{fcnn_forward.1} parent=0 // pred_check_branch
    %472 = sbr.rel (0) target = $region37
  $region36: #{fcnn_forward.1} parent=0 // pred_region
    _
  $region37: #{fcnn_forward.1} parent=0 // pred_fallthru
    _

</llo_original>
